<compile_context>
chip_gen: v5e
topology: v5e:2x2
jax: 0.10.0
libtpu: 0.0.40
codegen_flags: <defaults>
</compile_context>

<pallas_src>
import functools

import jax
import jax.numpy as jnp
from jax.experimental import pallas as pl
from jax.experimental.pallas import tpu as pltpu


_MAX_ROW_TILE = 8192   # hard cap; amortizes ~0.35us/grid-step overhead to <5%


# --------------------------- generation detection ----------------------------

@functools.lru_cache(maxsize=1)
def _tpu_defaults():
    """-> (tensorcores per device, VMEM tile budget bytes, scoped VMEM limit).

    Crude device_kind parsing with conservative fallbacks; only used as a
    tiling heuristic, never for correctness.
    """
    kind = ""
    try:
        kind = jax.devices()[0].device_kind.lower()
    except Exception:
        pass
    if "v5" in kind and ("lite" in kind or "v5e" in kind):
        return 1, 12 << 20, 16 << 20          # v5e: 1 TC, 16 MiB default scoped
    if "v6" in kind:
        return 1, 24 << 20, 28 << 20          # v6e: 1 TC, 32 MiB default scoped
    if "v7" in kind:
        return 2, 24 << 20, 28 << 20          # v7x: 2 TCs, 64 MiB physical VMEM
    if "v4" in kind or "v5p" in kind or "v5" in kind:
        return 2, 24 << 20, 28 << 20          # megacore parts: 2 TCs
    return 1, 12 << 20, None                  # unknown: be conservative


def _choose_row_tile(mr, *, lhs_row_bytes, out_row_bytes, num_tc, vmem_budget):
    """Packed LHS/out rows per grid step.

    Pick the single largest tile that fits the double-buffered (lhs + out)
    VMEM budget, capped at _MAX_ROW_TILE.  Split across TensorCores only on
    multi-TC parts and only when each shard keeps >= 512 packed rows — on
    single-TC v5e/v6e a forced multi-step grid is pure per-step overhead.
    """
    per_row = 2 * (lhs_row_bytes + out_row_bytes)       # double-buffered in+out
    t = min(mr, _MAX_ROW_TILE, max(16, vmem_budget // per_row))
    if num_tc > 1 and mr >= 2 * 512:
        t = min(t, -(-mr // num_tc))                    # shard across TCs
    if t >= mr:
        return mr
    return max(16, (t // 16) * 16)


# --------------------------------- kernel ------------------------------------

def _proj_kernel(x_ref, w_ref, b_ref, o_ref):
    # x_ref: (tmr, PACK*K)   bf16 lane-dense packed patches
    # w_ref: (PACK*K, PACK*E) bf16 block-diagonal weight (resident across grid)
    # b_ref: (1, PACK*E)     f32 tiled bias
    # o_ref: (tmr, PACK*E)   out_dtype lane-dense packed outputs
    acc = jnp.dot(x_ref[...], w_ref[...], preferred_element_type=jnp.float32)
    o_ref[...] = (acc + b_ref[...]).astype(o_ref.dtype)   # f32 acc, cast on store


def packed_patch_matmul(lhs, w_big, bias_big, *, out_dtype, fuse_input):
    """lhs: (Mr, PACK*K) bf16, w_big: (PACK*K, PACK*E) bf16,
    bias_big: (1, PACK*E) f32  ->  (Mr, PACK*E) out_dtype."""
    Mr, Kp = lhs.shape
    Kp2, Np = w_big.shape
    assert Kp == Kp2 and bias_big.shape == (1, Np)

    num_tc, vmem_budget, vmem_limit = _tpu_defaults()
    out_itemsize = jnp.dtype(out_dtype).itemsize
    tmr = _choose_row_tile(Mr,
                           lhs_row_bytes=Kp * 2,
                           out_row_bytes=Np * out_itemsize,
                           num_tc=num_tc,
                           vmem_budget=vmem_budget)
    grid = (pl.cdiv(Mr, tmr),)

    cp_kwargs = dict(dimension_semantics=("parallel",))
    if vmem_limit is not None:
        cp_kwargs["vmem_limit_bytes"] = vmem_limit
    if fuse_input:
        # Let XLA fuse the im2col producer (transpose + bf16 cast + repack)
        # into the pallas input -> no HBM round trip for the bf16 patches.
        cp_kwargs["allow_input_fusion"] = [True, False, False]

    cost = pl.CostEstimate(
        flops=2 * Mr * Kp * Np,
        transcendentals=0,
        bytes_accessed=Mr * Kp * 2 + Mr * Np * out_itemsize + Kp * Np * 2 + Np * 4,
    )

    return pl.pallas_call(
        _proj_kernel,
        out_shape=jax.ShapeDtypeStruct((Mr, Np), out_dtype),
        grid_spec=pltpu.PrefetchScalarGridSpec(
            num_scalar_prefetch=0,
            grid=grid,
            in_specs=[
                pl.BlockSpec((tmr, Kp), lambda i: (i, 0)),
                pl.BlockSpec((Kp, Np), lambda i: (0, 0)),   # weight stays resident
                pl.BlockSpec((1, Np), lambda i: (0, 0)),    # bias stays resident
            ],
            out_specs=pl.BlockSpec((tmr, Np), lambda i: (i, 0)),
        ),
        compiler_params=pltpu.CompilerParams(**cp_kwargs),
        cost_estimate=cost,
    )(lhs, w_big, bias_big)


# ------------------------------- forward pass --------------------------------

@functools.partial(jax.jit, static_argnames=("k", "ip", "pack", "out_dtype", "fuse"))
def _patch_embed_forward(x, w_big, bias_big, *, k, ip, pack, out_dtype, fuse):
    """x: (B, C, H, W) f32 or bf16 NCHW -> (B, num_patches, ip, ip, E)."""
    B, C, H, W = x.shape
    K = C * k * k
    E = bias_big.shape[-1] // pack
    Hc, Wc = H // k, W // k
    pr0, pr1 = Hc // ip, Wc // ip
    num_patches = pr0 * pr1
    M = B * Hc * Wc                     # total conv output positions (patches)

    # Fused im2col (one XLA pass; with allow_input_fusion it fuses into the
    # kernel's input DMA).  Patch order (b, p0, p1, ih, iw); per-patch feature
    # order (c, kh, kw) matches weight.reshape(E, C*k*k).  This ordering makes
    # the matmul output already elementwise-identical to the final layout.
    patches = (x.reshape(B, C, pr0, ip, k, pr1, ip, k)
                 .transpose(0, 2, 5, 3, 6, 1, 4, 7)   # (B,pr0,pr1,ih,iw,C,kh,kw)
                 .astype(jnp.bfloat16)                # no-op if x is already bf16
                 .reshape(M, K))

    if M % pack != 0:                   # never taken when pack | ip*ip (default)
        patches = jnp.pad(patches, ((0, pack - M % pack), (0, 0)))
    lhs = patches.reshape(-1, pack * K)                 # (Mr, pack*K) bf16

    out_packed = packed_patch_matmul(lhs, w_big, bias_big,
                                     out_dtype=out_dtype, fuse_input=fuse)

    out = out_packed.reshape(-1, E)[:M]                 # no-op slice when unpadded
    return out.reshape(B, num_patches, ip, ip, E)       # pure reshape, no copy


class PatchEmbedPallas:
    """JAX/Pallas re-implementation of mmpretrain HiViT PatchEmbed (norm=None)."""

    def __init__(self, img_size=16, patch_size=8, inner_patches=4,
                 in_chans=4, embed_dim=32, out_dtype=jnp.bfloat16, key=None):
        self.img_size = (img_size, img_size)
        self.patch_size = (patch_size, patch_size)
        self.inner_patches = inner_patches
        self.patches_resolution = [img_size // patch_size, img_size // patch_size]
        self.num_patches = self.patches_resolution[0] * self.patches_resolution[1]
        self.in_chans = in_chans
        self.embed_dim = embed_dim
        self.out_dtype = out_dtype       # bf16 default: HBM-bound op, f32 acc kept
        conv_size = patch_size // inner_patches
        self.conv_size = conv_size       # kernel_size == stride, padding == 0

        # Deterministic parameter init (synthetic; mimics Conv2d default scale).
        if key is None:
            key = jax.random.PRNGKey(42)
        kw_, kb_ = jax.random.split(key)
        fan_in = in_chans * conv_size * conv_size
        bound = 1.0 / (fan_in ** 0.5)
        # weight layout matches nn.Conv2d: (out_ch, in_ch, kh, kw)
        self.weight = jax.random.uniform(
            kw_, (embed_dim, in_chans, conv_size, conv_size),
            minval=-bound, maxval=bound, dtype=jnp.float32)
        self.bias = jax.random.uniform(
            kb_, (embed_dim,), minval=-bound, maxval=bound, dtype=jnp.float32)

        # PACK patches per MXU row; lane-dense when K divides 128 (default K=16).
        K = in_chans * conv_size * conv_size
        self.pack = (128 // K) if (K <= 128 and 128 % K == 0) else max(1, 128 // K)

        # Hoisted parameter prep (done once, not per forward):
        #   w_big   : (PACK*K, PACK*E) bf16 block-diagonal weight
        #   bias_big: (1, PACK*E) f32 tiled bias (bias add stays in f32)
        w_flat = self.weight.reshape(embed_dim, K).T
        self.w_big = jnp.kron(jnp.eye(self.pack, dtype=jnp.float32),
                              w_flat).astype(jnp.bfloat16)
        self.bias_big = jnp.tile(self.bias, (self.pack,)).reshape(1, -1)

        self._fuse = None                # resolved on first call (input-fusion probe)

    def __call__(self, x):
        kwargs = dict(k=self.conv_size, ip=self.inner_patches, pack=self.pack,
                      out_dtype=self.out_dtype)
        if self._fuse is None:
            # Probe allow_input_fusion once; fall back cleanly if this
            # generation / jax build rejects fusing the im2col producer.
            try:
                out = _patch_embed_forward(x, self.w_big, self.bias_big,
                                           fuse=True, **kwargs)
                jax.block_until_ready(out)
                self._fuse = True
                return out
            except Exception:
                self._fuse = False
        return _patch_embed_forward(x, self.w_big, self.bias_big,
                                    fuse=self._fuse, **kwargs)


# -------------------------------- reference ----------------------------------

def _reference_forward(module, x):
    """Pure-JAX reference mirroring the PyTorch forward (bf16 operands, f32 acc)."""
    y = jax.lax.conv_general_dilated(
        x.astype(jnp.bfloat16), module.weight.astype(jnp.bfloat16),
        window_strides=(module.conv_size, module.conv_size),
        padding="VALID",
        dimension_numbers=("NCHW", "OIHW", "NCHW"),
        preferred_element_type=jnp.float32)
    y = y + module.bias.reshape(1, -1, 1, 1)
    B, E, Hc, Wc = y.shape
    ip = module.inner_patches
    pr0, pr1 = Hc // ip, Wc // ip
    y = (y.reshape(B, E, pr0, ip, pr1, ip)
          .transpose(0, 2, 4, 3, 5, 1)
          .reshape(B, pr0 * pr1, ip, ip, E))
    return y


if __name__ == "__main__":
    module = PatchEmbedPallas(img_size=16, patch_size=8, inner_patches=4,
                              in_chans=4, embed_dim=32, key=jax.random.PRNGKey(1))

    # Primary check: module-consistent small shape (B=2, C=4, 16x16 image),
    # default bf16 output path.
    B, C, H, W = 2, 4, 16, 16
    x = jax.random.normal(jax.random.PRNGKey(0), (B, C, H, W), dtype=jnp.float32)
    out = jax.block_until_ready(module(x))
    ref = jax.block_until_ready(_reference_forward(module, x))
    assert out.shape == (B, module.num_patches, 4, 4, 32), out.shape
    assert out.dtype == jnp.bfloat16, out.dtype
    assert jnp.allclose(out.astype(jnp.float32), ref, atol=1e-2, rtol=1e-2), \
        float(jnp.max(jnp.abs(out.astype(jnp.float32) - ref)))

    # f32-output path (same weights; matches the original module's f32 return).
    module_f32 = PatchEmbedPallas(img_size=16, patch_size=8, inner_patches=4,
                                  in_chans=4, embed_dim=32,
                                  out_dtype=jnp.float32, key=jax.random.PRNGKey(1))
    out_f32 = jax.block_until_ready(module_f32(x))
    assert out_f32.dtype == jnp.float32
    assert jnp.allclose(out_f32, ref, atol=1e-3, rtol=1e-3), \
        float(jnp.max(jnp.abs(out_f32 - ref)))

    # Larger batch: exercises larger row tiles (still a single grid step on
    # 1-TC parts; only v7x-class parts would shard once Mr >= 1024).
    x2 = jax.random.normal(jax.random.PRNGKey(2), (8, C, H, W), dtype=jnp.float32)
    out2 = jax.block_until_ready(module(x2))
    ref2 = jax.block_until_ready(_reference_forward(module, x2))
    assert out2.shape == (8, module.num_patches, 4, 4, 32), out2.shape
    assert jnp.allclose(out2.astype(jnp.float32), ref2, atol=1e-2, rtol=1e-2), \
        float(jnp.max(jnp.abs(out2.astype(jnp.float32) - ref2)))

    print("KERNEL_OK")
</pallas_src>

<mosaic_0001>
module attributes {stable_mosaic.version = 11 : i64} {
  func.func @_proj_kernel(%arg0: i32, %arg1: memref<16x128xbf16, #tpu.memory_space<vmem>>, %arg2: memref<128x256xbf16, #tpu.memory_space<vmem>>, %arg3: memref<1x256xf32, #tpu.memory_space<vmem>>, %arg4: memref<16x256xbf16, #tpu.memory_space<vmem>>) attributes {dimension_semantics = [#tpu.dimension_semantics<parallel>], iteration_bounds = array<i64: 1>, scalar_prefetch = 0 : i64, scratch_operands = 0 : i64, tpu.core_type = #tpu.core_type<tc>, window_params = [{transform_indices = @transform_0, window_bounds = array<i64: 16, 128>}, {pipeline_mode = #tpu.pipeline_mode<synchronous>, transform_indices = @transform_1, window_bounds = array<i64: 128, 256>}, {pipeline_mode = #tpu.pipeline_mode<synchronous>, transform_indices = @transform_2, window_bounds = array<i64: 1, 256>}, {transform_indices = @transform_3, window_bounds = array<i64: 16, 256>}]} {
    %c0 = arith.constant 0 : index
    %c0_0 = arith.constant 0 : index
    %0 = vector.load %arg1[%c0, %c0_0] : memref<16x128xbf16, #tpu.memory_space<vmem>>, vector<16x128xbf16>
    %c0_1 = arith.constant 0 : index
    %c0_2 = arith.constant 0 : index
    %1 = vector.load %arg2[%c0_1, %c0_2] : memref<128x256xbf16, #tpu.memory_space<vmem>>, vector<128x256xbf16>
    %cst = arith.constant dense<0.000000e+00> : vector<16x256xf32>
    %2 = tpu.matmul %0, %1, %cst {dimension_numbers = #tpu.dot_dimension_numbers<[1], [0], [0], [1], [0, 0, 1, 1], [], []>} : vector<16x128xbf16>, vector<128x256xbf16>, vector<16x256xf32> -> vector<16x256xf32>
    %c0_3 = arith.constant 0 : index
    %c0_4 = arith.constant 0 : index
    %3 = vector.load %arg3[%c0_3, %c0_4] : memref<1x256xf32, #tpu.memory_space<vmem>>, vector<1x256xf32>
    %4 = vector.broadcast %3 : vector<1x256xf32> to vector<16x256xf32>
    %5 = arith.addf %2, %4 : vector<16x256xf32>
    %6 = arith.truncf %5 : vector<16x256xf32> to vector<16x256xbf16>
    %c0_5 = arith.constant 0 : index
    %c0_6 = arith.constant 0 : index
    %7 = vector.load %arg4[%c0_5, %c0_6] : memref<16x256xbf16, #tpu.memory_space<vmem>>, vector<16x256xbf16>
    tpu.vector_store %arg4[%c0_5, %c0_6], %6 {strides = array<i32>} : memref<16x256xbf16, #tpu.memory_space<vmem>>, vector<16x256xbf16>,
    return
  }
  func.func @transform_0(%arg0: i32) -> (i32, i32) {
    %c0_i32 = arith.constant 0 : i32
    %c0_i32_0 = arith.constant 0 : i32
    return %arg0, %c0_i32 : i32, i32
  }
  func.func @transform_1(%arg0: i32) -> (i32, i32) {
    %c0_i32 = arith.constant 0 : i32
    %c0_i32_0 = arith.constant 0 : i32
    %c0_i32_1 = arith.constant 0 : i32
    return %c0_i32, %c0_i32_0 : i32, i32
  }
  func.func @transform_2(%arg0: i32) -> (i32, i32) {
    %c0_i32 = arith.constant 0 : i32
    %c0_i32_0 = arith.constant 0 : i32
    %c0_i32_1 = arith.constant 0 : i32
    return %c0_i32, %c0_i32_0 : i32, i32
  }
  func.func @transform_3(%arg0: i32) -> (i32, i32) {
    %c0_i32 = arith.constant 0 : i32
    %c0_i32_0 = arith.constant 0 : i32
    return %arg0, %c0_i32 : i32, i32
  }
}

module attributes {stable_mosaic.version = 11 : i64} {
  func.func @_proj_kernel(%arg0: i32, %arg1: memref<16x128xbf16, #tpu.memory_space<vmem>>, %arg2: memref<128x256xbf16, #tpu.memory_space<vmem>>, %arg3: memref<1x256xf32, #tpu.memory_space<vmem>>, %arg4: memref<16x256xbf16, #tpu.memory_space<vmem>>) attributes {dimension_semantics = [#tpu.dimension_semantics<parallel>], iteration_bounds = array<i64: 1>, scalar_prefetch = 0 : i64, scratch_operands = 0 : i64, tpu.core_type = #tpu.core_type<tc>, window_params = [{transform_indices = @transform_0, window_bounds = array<i64: 16, 128>}, {pipeline_mode = #tpu.pipeline_mode<synchronous>, transform_indices = @transform_1, window_bounds = array<i64: 128, 256>}, {pipeline_mode = #tpu.pipeline_mode<synchronous>, transform_indices = @transform_2, window_bounds = array<i64: 1, 256>}, {transform_indices = @transform_3, window_bounds = array<i64: 16, 256>}]} {
    %c0 = arith.constant 0 : index
    %c0_0 = arith.constant 0 : index
    %0 = vector.load %arg1[%c0, %c0_0] : memref<16x128xbf16, #tpu.memory_space<vmem>>, vector<16x128xbf16>
    %c0_1 = arith.constant 0 : index
    %c0_2 = arith.constant 0 : index
    %1 = vector.load %arg2[%c0_1, %c0_2] : memref<128x256xbf16, #tpu.memory_space<vmem>>, vector<128x256xbf16>
    %cst = arith.constant dense<0.000000e+00> : vector<16x256xf32>
    %2 = tpu.matmul %0, %1, %cst {dimension_numbers = #tpu.dot_dimension_numbers<[1], [0], [0], [1], [0, 0, 1, 1], [], []>} : vector<16x128xbf16>, vector<128x256xbf16>, vector<16x256xf32> -> vector<16x256xf32>
    %c0_3 = arith.constant 0 : index
    %c0_4 = arith.constant 0 : index
    %3 = vector.load %arg3[%c0_3, %c0_4] : memref<1x256xf32, #tpu.memory_space<vmem>>, vector<1x256xf32>
    %4 = vector.broadcast %3 : vector<1x256xf32> to vector<16x256xf32>
    %5 = arith.addf %2, %4 : vector<16x256xf32>
    %6 = arith.truncf %5 : vector<16x256xf32> to vector<16x256xbf16>
    %c0_5 = arith.constant 0 : index
    %c0_6 = arith.constant 0 : index
    %7 = vector.load %arg4[%c0_5, %c0_6] : memref<16x256xbf16, #tpu.memory_space<vmem>>, vector<16x256xbf16>
    tpu.vector_store %arg4[%c0_5, %c0_6], %6 {strides = array<i32>} : memref<16x256xbf16, #tpu.memory_space<vmem>>, vector<16x256xbf16>,
    return
  }
  func.func @transform_0(%arg0: i32) -> (i32, i32) {
    %c0_i32 = arith.constant 0 : i32
    %c0_i32_0 = arith.constant 0 : i32
    return %arg0, %c0_i32 : i32, i32
  }
  func.func @transform_1(%arg0: i32) -> (i32, i32) {
    %c0_i32 = arith.constant 0 : i32
    %c0_i32_0 = arith.constant 0 : i32
    %c0_i32_1 = arith.constant 0 : i32
    return %c0_i32, %c0_i32_0 : i32, i32
  }
  func.func @transform_2(%arg0: i32) -> (i32, i32) {
    %c0_i32 = arith.constant 0 : i32
    %c0_i32_0 = arith.constant 0 : i32
    %c0_i32_1 = arith.constant 0 : i32
    return %c0_i32, %c0_i32_0 : i32, i32
  }
  func.func @transform_3(%arg0: i32) -> (i32, i32) {
    %c0_i32 = arith.constant 0 : i32
    %c0_i32_0 = arith.constant 0 : i32
    return %arg0, %c0_i32 : i32, i32
  }
}

</mosaic_0001>

<llo_original>
// kernel: _patch_embed_forward.1
$region0: #{_patch_embed_forward.1}
  #allocation0 [shape = 'u32[]', space=smem, size = 0x4, offset = 0x4, fixed_abs, tag = 'smem constant byte address 0x4 - core index']
  #allocation1 [shape = 'u32[72,128]{1,0:T(1,128)}', space=vmem, size = 0x9000, scoped, tag = 'internal scratch']
  %s0 = inlined_call_operand.vmem [shape: bf16[16,128], index: 0, kind: input, shape index: {}]
  %s1 = inlined_call_operand.vmem [shape: bf16[128,256], index: 1, kind: input, shape index: {}]
  %s2 = inlined_call_operand.vmem [shape: f32[1,256], index: 2, kind: input, shape index: {}]
  %s3 = inlined_call_operand.vmem [shape: bf16[16,256], index: 3, kind: output, shape index: {}]
  %s4 = sld [smem:[#allocation0]]
  $region22: #{_patch_embed_forward.1} parent=0
    _
  %s6 = ssub.s32 1, %s4
  %s7 = scalar_select 0, %s6, %s4
  // Predicated region
  $region2: #{_patch_embed_forward.1} parent=0 // pred_check
    _
  $region3: #{_patch_embed_forward.1} parent=0 // pred_check_branch
    %9 = sbr.rel (0) target = $region5
  $region4: #{_patch_embed_forward.1} parent=0 // pred_region
    _
  $region5: #{_patch_embed_forward.1} parent=0 // pred_fallthru
    _
  // Predicated region
  $region6: #{_patch_embed_forward.1} parent=0 // pred_check
    _
  $region7: #{_patch_embed_forward.1} parent=0 // pred_check_branch
    %11 = sbr.rel (0) target = $region9
  $region8: #{_patch_embed_forward.1} parent=0 // pred_region
    _
  $region9: #{_patch_embed_forward.1} parent=0 // pred_fallthru
    _
  // Predicated region
  $region10: #{_patch_embed_forward.1} parent=0 // pred_check
    _
  $region11: #{_patch_embed_forward.1} parent=0 // pred_check_branch
    %13 = sbr.rel (0) target = $region13
  $region12: #{_patch_embed_forward.1} parent=0 // pred_region
    _
  $region13: #{_patch_embed_forward.1} parent=0 // pred_fallthru
    _
  %v14 = vld [vmem:[%s0] sm:$0xf]
  %v15 = vld [vmem:[%s0 + $0x4] sm:$0xf]
  %v16 = vld [vmem:[%s1] sm:$0xff]
  %v17 = vld [vmem:[%s1 + $0x8] sm:$0xff]
  %v18 = vld [vmem:[%s1 + $0x10] sm:$0xff]
  %v19 = vld [vmem:[%s1 + $0x18] sm:$0xff]
  %v20 = vld [vmem:[%s1 + $0x20] sm:$0xff]
  %v21 = vld [vmem:[%s1 + $0x28] sm:$0xff]
  %v22 = vld [vmem:[%s1 + $0x30] sm:$0xff]
  %v23 = vld [vmem:[%s1 + $0x38] sm:$0xff]
  %v24 = vld [vmem:[%s1 + $0x40] sm:$0xff]
  %v25 = vld [vmem:[%s1 + $0x48] sm:$0xff]
  %v26 = vld [vmem:[%s1 + $0x50] sm:$0xff]
  %v27 = vld [vmem:[%s1 + $0x58] sm:$0xff]
  %v28 = vld [vmem:[%s1 + $0x60] sm:$0xff]
  %v29 = vld [vmem:[%s1 + $0x68] sm:$0xff]
  %v30 = vld [vmem:[%s1 + $0x70] sm:$0xff]
  %v31 = vld [vmem:[%s1 + $0x78] sm:$0xff]
  %v32 = vld [vmem:[%s2] sm:$0x3]
  %v34 = vperm.slane %v32, 0
  %v35 = vperm.slane %v32, 1
  %v40 = vunpack.c.l.b16 %v14
  %v41 = vunpack.c.l.b16 %v15
  %v42 = vpack.c.b16 %v41, %v40
  %v60 = vunpack.c.l.b16 %v16
  %v61 = vunpack.c.h.b16 %v16
  %v62 = vunpack.c.l.b16 %v17
  %v63 = vunpack.c.h.b16 %v17
  %v64 = vunpack.c.l.b16 %v18
  %v65 = vunpack.c.h.b16 %v18
  %v66 = vunpack.c.l.b16 %v19
  %v67 = vunpack.c.h.b16 %v19
  %v68 = vunpack.c.l.b16 %v20
  %v69 = vunpack.c.h.b16 %v20
  %v70 = vunpack.c.l.b16 %v21
  %v71 = vunpack.c.h.b16 %v21
  %v72 = vunpack.c.l.b16 %v22
  %v73 = vunpack.c.h.b16 %v22
  %v74 = vunpack.c.l.b16 %v23
  %v75 = vunpack.c.h.b16 %v23
  %v76 = vunpack.c.l.b16 %v24
  %v77 = vunpack.c.h.b16 %v24
  %v78 = vunpack.c.l.b16 %v25
  %v79 = vunpack.c.h.b16 %v25
  %v80 = vunpack.c.l.b16 %v26
  %v81 = vunpack.c.h.b16 %v26
  %v82 = vunpack.c.l.b16 %v27
  %v83 = vunpack.c.h.b16 %v27
  %v84 = vunpack.c.l.b16 %v28
  %v85 = vunpack.c.h.b16 %v28
  %v86 = vunpack.c.l.b16 %v29
  %v87 = vunpack.c.h.b16 %v29
  %v88 = vunpack.c.l.b16 %v30
  %v89 = vunpack.c.h.b16 %v30
  %v90 = vunpack.c.l.b16 %v31
  %v91 = vunpack.c.h.b16 %v31
  %v92 = vpack.c.b16 %v62, %v60
  %v93 = vpack.c.b16 %v63, %v61
  %v94 = vpack.c.b16 %v66, %v64
  %v95 = vpack.c.b16 %v67, %v65
  %v96 = vpack.c.b16 %v70, %v68
  %v97 = vpack.c.b16 %v71, %v69
  %v98 = vpack.c.b16 %v74, %v72
  %v99 = vpack.c.b16 %v75, %v73
  %v100 = vpack.c.b16 %v78, %v76
  %v101 = vpack.c.b16 %v79, %v77
  %v102 = vpack.c.b16 %v82, %v80
  %v103 = vpack.c.b16 %v83, %v81
  %v104 = vpack.c.b16 %v86, %v84
  %v105 = vpack.c.b16 %v87, %v85
  %v106 = vpack.c.b16 %v90, %v88
  %v107 = vpack.c.b16 %v91, %v89
  %124 = vmatpush.bf16.msra.mxu0 %v106
  %125 = vmatpush.bf16.msra.mxu0 %v104
  %126 = vmatpush.bf16.msra.mxu0 %v102
  %127 = vmatpush.bf16.msra.mxu0 %v100
  %128 = vmatpush.bf16.msra.mxu0 %v98
  %129 = vmatpush.bf16.msra.mxu0 %v96
  %130 = vmatpush.bf16.msra.mxu0 %v94
  %131 = vmatpush.bf16.msra.mxu0 %v92
  %132 = vmatmul.bf16.gmra.mxu0 %v42
  %v133 = vpop.f32.mrf.mxu0
  %v134 = vadd.f32 %v34, %v133
  %v135 = vpop.f32.mrf.mxu0
  %v136 = vadd.f32 %v34, %v135
  %137 = vdwg.mxu0
  %138 = vmatpush.bf16.msra.mxu0 %v107
  %139 = vmatpush.bf16.msra.mxu0 %v105
  %140 = vmatpush.bf16.msra.mxu0 %v103
  %141 = vmatpush.bf16.msra.mxu0 %v101
  %142 = vmatpush.bf16.msra.mxu0 %v99
  %143 = vmatpush.bf16.msra.mxu0 %v97
  %144 = vmatpush.bf16.msra.mxu0 %v95
  %145 = vmatpush.bf16.msra.mxu0 %v93
  %146 = vmatmul.bf16.gmra.mxu0 %v42
  %v147 = vpop.f32.mrf.mxu0
  %v148 = vadd.f32 %v35, %v147
  %v149 = vpop.f32.mrf.mxu0
  %v150 = vadd.f32 %v35, %v149
  %151 = vdwg.mxu0
  %v152 = vpack.c.bf16 %v148, %v134
  %v153 = vpack.c.bf16 %v150, %v136
  %154 = vst [vmem:[%s3] sm:$0xff] %v152
  %155 = vst [vmem:[%s3 + $0x8] sm:$0xff] %v153
  // Predicated region
  $region14: #{_patch_embed_forward.1} parent=0 // pred_check
    _
  $region15: #{_patch_embed_forward.1} parent=0 // pred_check_branch
    %157 = sbr.rel (0) target = $region17
  $region16: #{_patch_embed_forward.1} parent=0 // pred_region
    _
  $region17: #{_patch_embed_forward.1} parent=0 // pred_fallthru
    _
  // Predicated region
  $region18: #{_patch_embed_forward.1} parent=0 // pred_check
    _
  $region19: #{_patch_embed_forward.1} parent=0 // pred_check_branch
    %159 = sbr.rel (0) target = $region21
  $region20: #{_patch_embed_forward.1} parent=0 // pred_region
    _
  $region21: #{_patch_embed_forward.1} parent=0 // pred_fallthru
    _

// kernel: _patch_embed_forward.1
$region0: #{_patch_embed_forward.1}
  #allocation0 [shape = 'u32[]', space=smem, size = 0x4, offset = 0x4, fixed_abs, tag = 'smem constant byte address 0x4 - core index']
  #allocation1 [shape = 'u32[72,128]{1,0:T(1,128)}', space=vmem, size = 0x9000, scoped, tag = 'internal scratch']
  %s0 = inlined_call_operand.vmem [shape: bf16[16,128], index: 0, kind: input, shape index: {}]
  %s1 = inlined_call_operand.vmem [shape: bf16[128,256], index: 1, kind: input, shape index: {}]
  %s2 = inlined_call_operand.vmem [shape: f32[1,256], index: 2, kind: input, shape index: {}]
  %s3 = inlined_call_operand.vmem [shape: bf16[16,256], index: 3, kind: output, shape index: {}]
  %s4 = sld [smem:[#allocation0]]
  $region22: #{_patch_embed_forward.1} parent=0
    _
  %s6 = ssub.s32 1, %s4
  %s7 = scalar_select 0, %s6, %s4
  // Predicated region
  $region2: #{_patch_embed_forward.1} parent=0 // pred_check
    _
  $region3: #{_patch_embed_forward.1} parent=0 // pred_check_branch
    %9 = sbr.rel (0) target = $region5
  $region4: #{_patch_embed_forward.1} parent=0 // pred_region
    _
  $region5: #{_patch_embed_forward.1} parent=0 // pred_fallthru
    _
  // Predicated region
  $region6: #{_patch_embed_forward.1} parent=0 // pred_check
    _
  $region7: #{_patch_embed_forward.1} parent=0 // pred_check_branch
    %11 = sbr.rel (0) target = $region9
  $region8: #{_patch_embed_forward.1} parent=0 // pred_region
    _
  $region9: #{_patch_embed_forward.1} parent=0 // pred_fallthru
    _
  // Predicated region
  $region10: #{_patch_embed_forward.1} parent=0 // pred_check
    _
  $region11: #{_patch_embed_forward.1} parent=0 // pred_check_branch
    %13 = sbr.rel (0) target = $region13
  $region12: #{_patch_embed_forward.1} parent=0 // pred_region
    _
  $region13: #{_patch_embed_forward.1} parent=0 // pred_fallthru
    _
  %v14 = vld [vmem:[%s0] sm:$0xf]
  %v15 = vld [vmem:[%s0 + $0x4] sm:$0xf]
  %v16 = vld [vmem:[%s1] sm:$0xff]
  %v17 = vld [vmem:[%s1 + $0x8] sm:$0xff]
  %v18 = vld [vmem:[%s1 + $0x10] sm:$0xff]
  %v19 = vld [vmem:[%s1 + $0x18] sm:$0xff]
  %v20 = vld [vmem:[%s1 + $0x20] sm:$0xff]
  %v21 = vld [vmem:[%s1 + $0x28] sm:$0xff]
  %v22 = vld [vmem:[%s1 + $0x30] sm:$0xff]
  %v23 = vld [vmem:[%s1 + $0x38] sm:$0xff]
  %v24 = vld [vmem:[%s1 + $0x40] sm:$0xff]
  %v25 = vld [vmem:[%s1 + $0x48] sm:$0xff]
  %v26 = vld [vmem:[%s1 + $0x50] sm:$0xff]
  %v27 = vld [vmem:[%s1 + $0x58] sm:$0xff]
  %v28 = vld [vmem:[%s1 + $0x60] sm:$0xff]
  %v29 = vld [vmem:[%s1 + $0x68] sm:$0xff]
  %v30 = vld [vmem:[%s1 + $0x70] sm:$0xff]
  %v31 = vld [vmem:[%s1 + $0x78] sm:$0xff]
  %v32 = vld [vmem:[%s2] sm:$0x3]
  %v34 = vperm.slane %v32, 0
  %v35 = vperm.slane %v32, 1
  %v40 = vunpack.c.l.b16 %v14
  %v41 = vunpack.c.l.b16 %v15
  %v42 = vpack.c.b16 %v41, %v40
  %v60 = vunpack.c.l.b16 %v16
  %v61 = vunpack.c.h.b16 %v16
  %v62 = vunpack.c.l.b16 %v17
  %v63 = vunpack.c.h.b16 %v17
  %v64 = vunpack.c.l.b16 %v18
  %v65 = vunpack.c.h.b16 %v18
  %v66 = vunpack.c.l.b16 %v19
  %v67 = vunpack.c.h.b16 %v19
  %v68 = vunpack.c.l.b16 %v20
  %v69 = vunpack.c.h.b16 %v20
  %v70 = vunpack.c.l.b16 %v21
  %v71 = vunpack.c.h.b16 %v21
  %v72 = vunpack.c.l.b16 %v22
  %v73 = vunpack.c.h.b16 %v22
  %v74 = vunpack.c.l.b16 %v23
  %v75 = vunpack.c.h.b16 %v23
  %v76 = vunpack.c.l.b16 %v24
  %v77 = vunpack.c.h.b16 %v24
  %v78 = vunpack.c.l.b16 %v25
  %v79 = vunpack.c.h.b16 %v25
  %v80 = vunpack.c.l.b16 %v26
  %v81 = vunpack.c.h.b16 %v26
  %v82 = vunpack.c.l.b16 %v27
  %v83 = vunpack.c.h.b16 %v27
  %v84 = vunpack.c.l.b16 %v28
  %v85 = vunpack.c.h.b16 %v28
  %v86 = vunpack.c.l.b16 %v29
  %v87 = vunpack.c.h.b16 %v29
  %v88 = vunpack.c.l.b16 %v30
  %v89 = vunpack.c.h.b16 %v30
  %v90 = vunpack.c.l.b16 %v31
  %v91 = vunpack.c.h.b16 %v31
  %v92 = vpack.c.b16 %v62, %v60
  %v93 = vpack.c.b16 %v63, %v61
  %v94 = vpack.c.b16 %v66, %v64
  %v95 = vpack.c.b16 %v67, %v65
  %v96 = vpack.c.b16 %v70, %v68
  %v97 = vpack.c.b16 %v71, %v69
  %v98 = vpack.c.b16 %v74, %v72
  %v99 = vpack.c.b16 %v75, %v73
  %v100 = vpack.c.b16 %v78, %v76
  %v101 = vpack.c.b16 %v79, %v77
  %v102 = vpack.c.b16 %v82, %v80
  %v103 = vpack.c.b16 %v83, %v81
  %v104 = vpack.c.b16 %v86, %v84
  %v105 = vpack.c.b16 %v87, %v85
  %v106 = vpack.c.b16 %v90, %v88
  %v107 = vpack.c.b16 %v91, %v89
  %124 = vmatpush.bf16.msra.mxu0 %v106
  %125 = vmatpush.bf16.msra.mxu0 %v104
  %126 = vmatpush.bf16.msra.mxu0 %v102
  %127 = vmatpush.bf16.msra.mxu0 %v100
  %128 = vmatpush.bf16.msra.mxu0 %v98
  %129 = vmatpush.bf16.msra.mxu0 %v96
  %130 = vmatpush.bf16.msra.mxu0 %v94
  %131 = vmatpush.bf16.msra.mxu0 %v92
  %132 = vmatmul.bf16.gmra.mxu0 %v42
  %v133 = vpop.f32.mrf.mxu0
  %v134 = vadd.f32 %v34, %v133
  %v135 = vpop.f32.mrf.mxu0
  %v136 = vadd.f32 %v34, %v135
  %137 = vdwg.mxu0
  %138 = vmatpush.bf16.msra.mxu0 %v107
  %139 = vmatpush.bf16.msra.mxu0 %v105
  %140 = vmatpush.bf16.msra.mxu0 %v103
  %141 = vmatpush.bf16.msra.mxu0 %v101
  %142 = vmatpush.bf16.msra.mxu0 %v99
  %143 = vmatpush.bf16.msra.mxu0 %v97
  %144 = vmatpush.bf16.msra.mxu0 %v95
  %145 = vmatpush.bf16.msra.mxu0 %v93
  %146 = vmatmul.bf16.gmra.mxu0 %v42
  %v147 = vpop.f32.mrf.mxu0
  %v148 = vadd.f32 %v35, %v147
  %v149 = vpop.f32.mrf.mxu0
  %v150 = vadd.f32 %v35, %v149
  %151 = vdwg.mxu0
  %v152 = vpack.c.bf16 %v148, %v134
  %v153 = vpack.c.bf16 %v150, %v136
  %154 = vst [vmem:[%s3] sm:$0xff] %v152
  %155 = vst [vmem:[%s3 + $0x8] sm:$0xff] %v153
  // Predicated region
  $region14: #{_patch_embed_forward.1} parent=0 // pred_check
    _
  $region15: #{_patch_embed_forward.1} parent=0 // pred_check_branch
    %157 = sbr.rel (0) target = $region17
  $region16: #{_patch_embed_forward.1} parent=0 // pred_region
    _
  $region17: #{_patch_embed_forward.1} parent=0 // pred_fallthru
    _
  // Predicated region
  $region18: #{_patch_embed_forward.1} parent=0 // pred_check
    _
  $region19: #{_patch_embed_forward.1} parent=0 // pred_check_branch
    %159 = sbr.rel (0) target = $region21
  $region20: #{_patch_embed_forward.1} parent=0 // pred_region
    _
  $region21: #{_patch_embed_forward.1} parent=0 // pred_fallthru
    _

</llo_original>
